<compile_context>
chip_gen: v7x
topology: tpu7x:2x2x1
jax: 0.10.0
libtpu: 0.0.40
codegen_flags: <defaults>
</compile_context>

<pallas_src>
import math
import jax
import jax.numpy as jnp
from jax.experimental import pallas as pl
from jax.experimental.pallas import tpu as pltpu


# ----------------------------------------------------------------------------
# Kernel factory: one fused matmul  [z | u | d | z*u] @ W_pack -> [z_next | y]
# ----------------------------------------------------------------------------
def _make_kernel(has_u: bool, has_d: bool, bilinear: bool):
    def kernel(*refs):
        out_ref = refs[-1]
        w_ref = refs[-2]
        idx = 0
        z = refs[idx][...]
        idx += 1
        parts = [z]
        u = None
        if has_u:
            u = refs[idx][...]
            idx += 1
            parts.append(u)
        if has_d:
            d = refs[idx][...]
            idx += 1
            parts.append(d)
        if bilinear:
            parts.append(z * u)
        x = parts[0] if len(parts) == 1 else jnp.concatenate(parts, axis=-1)
        out_ref[...] = jnp.dot(
            x, w_ref[...], preferred_element_type=jnp.float32
        ).astype(out_ref.dtype)

    return kernel


# ----------------------------------------------------------------------------
# Module-equivalent wrapper
# ----------------------------------------------------------------------------
class KoopmanOperatorPallas:
    """JAX/Pallas re-implementation of the PyTorch KoopmanOperator module."""

    _BATCH_TILE = 256  # rows per grid step when batch is large (multiple of 8)

    def __init__(self, n_z, n_d, n_u, n_y, bilinear_term=False, key=None):
        self.n_z, self.n_d, self.n_u, self.n_y = n_z, n_d, n_u, n_y
        self.has_u = n_u != 0
        self.has_d = n_d != 0
        self.is_autonomous = not self.has_u
        self.bilinear = bool(bilinear_term)
        if self.bilinear:
            # z * u only makes sense (and matches PyTorch broadcasting) when
            # n_u == n_z or n_u == 1, since B_uz is Linear(n_z, n_z).
            assert self.has_u and (n_u == n_z or n_u == 1), (
                "bilinear_term requires n_u == n_z (or n_u == 1 broadcast)")
        if key is None:
            key = jax.random.PRNGKey(0)

        def linear_weight(k, fan_out, fan_in):
            # PyTorch nn.Linear default init: U(-1/sqrt(fan_in), 1/sqrt(fan_in)),
            # weight shape (out, in).
            bound = 1.0 / math.sqrt(fan_in)
            return jax.random.uniform(k, (fan_out, fan_in), jnp.float32,
                                      -bound, bound)

        keys = jax.random.split(key, 5)
        self.A = linear_weight(keys[0], n_z, n_z)
        self.C = linear_weight(keys[1], n_y, n_z)
        self.B_u = linear_weight(keys[2], n_z, n_u) if self.has_u else None
        self.B_d = linear_weight(keys[3], n_z, n_d) if self.has_d else None
        self.B_uz = linear_weight(keys[4], n_z, n_z) if self.bilinear else None

        # Pre-pack all weights into a single (K_pack, n_z + n_y) slab, once.
        # Row blocks follow the in-kernel X ordering: [z, u, d, z*u].
        blocks = [jnp.concatenate([self.A.T, self.C.T], axis=1)]
        if self.has_u:
            blocks.append(jnp.concatenate(
                [self.B_u.T, jnp.zeros((n_u, n_y), jnp.float32)], axis=1))
        if self.has_d:
            blocks.append(jnp.concatenate(
                [self.B_d.T, jnp.zeros((n_d, n_y), jnp.float32)], axis=1))
        if self.bilinear:
            blocks.append(jnp.concatenate(
                [self.B_uz.T, jnp.zeros((n_z, n_y), jnp.float32)], axis=1))
        self.W_pack = jnp.concatenate(blocks, axis=0)

        self._cache = {}  # (batch, dtype) -> jitted forward callable

    # ------------------------------------------------------------------ call
    def __call__(self, z, d=None, u=None):
        if self.has_u and u is None:
            raise ValueError("u is required for a non-autonomous operator")
        if self.has_d and d is None:
            raise ValueError("d is required when n_d != 0")
        args = [z]
        if self.has_u:
            args.append(u)
        if self.has_d:
            args.append(d)
        fn = self._get_forward(z.shape[0], z.dtype)
        return fn(*args, self.W_pack)

    # -------------------------------------------------- cached compiled path
    def _get_forward(self, batch, dtype):
        key = (int(batch), jnp.dtype(dtype).name)
        fn = self._cache.get(key)
        if fn is not None:
            return fn

        n_z, n_y = self.n_z, self.n_y
        n_out = n_z + n_y
        k_pack = self.W_pack.shape[0]
        kernel = _make_kernel(self.has_u, self.has_d, self.bilinear)

        in_dims = [n_z]
        if self.has_u:
            in_dims.append(self.n_u)
        if self.has_d:
            in_dims.append(self.n_d)

        tile_b = self._BATCH_TILE
        if batch >= 2 * tile_b and batch % tile_b == 0:
            # Row-tiled grid over batch; weights as one full (untiled) block so
            # they are loaded into VMEM once and reused across all steps.
            grid = (batch // tile_b,)
            in_specs = [pl.BlockSpec((tile_b, dim), lambda i: (i, 0))
                        for dim in in_dims]
            in_specs.append(pl.BlockSpec((k_pack, n_out), lambda i: (0, 0)))
            pallas_fn = pl.pallas_call(
                kernel,
                out_shape=jax.ShapeDtypeStruct((batch, n_out), dtype),
                grid=grid,
                in_specs=in_specs,
                out_specs=pl.BlockSpec((tile_b, n_out), lambda i: (i, 0)),
                compiler_params=pltpu.CompilerParams(
                    dimension_semantics=("parallel",)),
            )
        else:
            # Tiny problem: everything as full-array VMEM blocks, no grid.
            vmem = pl.BlockSpec(memory_space=pltpu.MemorySpace.VMEM)
            pallas_fn = pl.pallas_call(
                kernel,
                out_shape=jax.ShapeDtypeStruct((batch, n_out), dtype),
                in_specs=[vmem] * (len(in_dims) + 1),
                out_specs=vmem,
            )

        def forward(*call_args):
            *xs, w = call_args
            out = pallas_fn(*xs, w.astype(xs[0].dtype))
            return out[:, :n_z], out[:, n_z:]

        fn = jax.jit(forward)
        self._cache[key] = fn
        return fn

    # --------------------------------------------------- pure-JAX reference
    def reference(self, z, d=None, u=None):
        z_next = z @ self.A.T
        if self.has_u:
            z_next = z_next + u @ self.B_u.T
        if self.has_d:
            z_next = z_next + d @ self.B_d.T
        if self.bilinear:
            z_next = z_next + (z * u) @ self.B_uz.T
        y = z @ self.C.T
        return z_next, y


# ----------------------------------------------------------------------------
# Demo / smoke test
# ----------------------------------------------------------------------------
if __name__ == "__main__":
    key = jax.random.PRNGKey(0)
    ks = jax.random.split(key, 9)

    batch, n_z, n_d, n_u, n_y = 2, 32, 3, 4, 8

    z = jax.random.normal(ks[1], (batch, n_z), jnp.float32)
    d = jax.random.normal(ks[2], (batch, n_d), jnp.float32)
    u = jax.random.normal(ks[3], (batch, n_u), jnp.float32)

    # --- controlled branch (A z + B_u u + B_d d) --------------------------
    op = KoopmanOperatorPallas(n_z, n_d, n_u, n_y, bilinear_term=False,
                               key=ks[0])
    z_next, y = op(z, d=d, u=u)
    jax.block_until_ready((z_next, y))
    z_ref, y_ref = op.reference(z, d=d, u=u)
    assert z_next.shape == (batch, n_z) and y.shape == (batch, n_y)
    assert jnp.allclose(z_next, z_ref, atol=1e-4, rtol=1e-4)
    assert jnp.allclose(y, y_ref, atol=1e-4, rtol=1e-4)

    # --- autonomous branch (A z only) --------------------------------------
    op_a = KoopmanOperatorPallas(n_z, 0, 0, n_y, bilinear_term=False,
                                 key=ks[4])
    zn_a, y_a = op_a(z)
    jax.block_until_ready((zn_a, y_a))
    zn_ar, y_ar = op_a.reference(z)
    assert jnp.allclose(zn_a, zn_ar, atol=1e-4, rtol=1e-4)
    assert jnp.allclose(y_a, y_ar, atol=1e-4, rtol=1e-4)

    # --- bilinear branch (requires n_u == n_z) ------------------------------
    op_b = KoopmanOperatorPallas(n_z, n_d, n_z, n_y, bilinear_term=True,
                                 key=ks[5])
    u_b = jax.random.normal(ks[6], (batch, n_z), jnp.float32)
    zn_b, y_b = op_b(z, d=d, u=u_b)
    jax.block_until_ready((zn_b, y_b))
    zn_br, y_br = op_b.reference(z, d=d, u=u_b)
    assert jnp.allclose(zn_b, zn_br, atol=1e-4, rtol=1e-4)
    assert jnp.allclose(y_b, y_br, atol=1e-4, rtol=1e-4)

    # --- large batch exercises the row-tiled "parallel" grid path ----------
    big_b = 512
    z_big = jax.random.normal(ks[7], (big_b, n_z), jnp.float32)
    d_big = jax.random.normal(ks[8], (big_b, n_d), jnp.float32)
    u_big = jax.random.normal(ks[3], (big_b, n_u), jnp.float32)
    zn_big, y_big = op(z_big, d=d_big, u=u_big)
    jax.block_until_ready((zn_big, y_big))
    zn_big_r, y_big_r = op.reference(z_big, d=d_big, u=u_big)
    assert jnp.allclose(zn_big, zn_big_r, atol=1e-4, rtol=1e-4)
    assert jnp.allclose(y_big, y_big_r, atol=1e-4, rtol=1e-4)

    print("KERNEL_OK")
</pallas_src>

<mosaic_0001>
module attributes {stable_mosaic.version = 11 : i64} {
  func.func @kernel(%arg0: memref<2x32xf32, #tpu.memory_space<vmem>>, %arg1: memref<2x4xf32, #tpu.memory_space<vmem>>, %arg2: memref<2x3xf32, #tpu.memory_space<vmem>>, %arg3: memref<39x40xf32, #tpu.memory_space<vmem>>, %arg4: memref<2x40xf32, #tpu.memory_space<vmem>>) attributes {dimension_semantics = [], scalar_prefetch = 0 : i64, scratch_operands = 0 : i64, tpu.core_type = #tpu.core_type<tc>} {
    %c0 = arith.constant 0 : index
    %c0_0 = arith.constant 0 : index
    %0 = vector.load %arg0[%c0, %c0_0] : memref<2x32xf32, #tpu.memory_space<vmem>>, vector<2x32xf32>
    %c0_1 = arith.constant 0 : index
    %c0_2 = arith.constant 0 : index
    %1 = vector.load %arg1[%c0_1, %c0_2] : memref<2x4xf32, #tpu.memory_space<vmem>>, vector<2x4xf32>
    %c0_3 = arith.constant 0 : index
    %c0_4 = arith.constant 0 : index
    %2 = vector.load %arg2[%c0_3, %c0_4] : memref<2x3xf32, #tpu.memory_space<vmem>>, vector<2x3xf32>
    %3 = tpu.concatenate %0, %1, %2 in 1 : vector<2x32xf32>, vector<2x4xf32>, vector<2x3xf32> -> vector<2x39xf32>
    %c0_5 = arith.constant 0 : index
    %c0_6 = arith.constant 0 : index
    %4 = vector.load %arg3[%c0_5, %c0_6] : memref<39x40xf32, #tpu.memory_space<vmem>>, vector<39x40xf32>
    %cst = arith.constant dense<0.000000e+00> : vector<2x40xf32>
    %5 = tpu.matmul %3, %4, %cst {dimension_numbers = #tpu.dot_dimension_numbers<[1], [0], [0], [1], [0, 0, 1, 1], [], []>} : vector<2x39xf32>, vector<39x40xf32>, vector<2x40xf32> -> vector<2x40xf32>
    %c0_7 = arith.constant 0 : index
    %c0_8 = arith.constant 0 : index
    %6 = vector.load %arg4[%c0_7, %c0_8] : memref<2x40xf32, #tpu.memory_space<vmem>>, vector<2x40xf32>
    tpu.vector_store %arg4[%c0_7, %c0_8], %5 {strides = array<i32>} : memref<2x40xf32, #tpu.memory_space<vmem>>, vector<2x40xf32>,
    return
  }
}

</mosaic_0001>

<llo_original>
// kernel: forward.1
$region0: #{forward.1}
  #allocation0 [shape = 'u32[]', space=smem, size = 0x4, offset = 0x4, fixed_abs, tag = 'smem constant byte address 0x4 - core index']
  #allocation1 [shape = 'u32[144,128]{1,0:T(1,128)}', space=vmem, size = 0x12000, scoped, tag = 'internal scratch']
  %s0 = inlined_call_operand.hbm [shape: f32[2,32], index: 0, kind: input, shape index: {}]
  %s1 = inlined_call_operand.vmem [shape: f32[2,4], index: 1, kind: input, shape index: {}]
  %s2 = inlined_call_operand.vmem [shape: f32[2,3], index: 2, kind: input, shape index: {}]
  %s3 = inlined_call_operand.hbm [shape: f32[39,40], index: 3, kind: input, shape index: {}]
  %s4 = inlined_call_operand.vmem [shape: f32[2,40], index: 4, kind: output, shape index: {}]
  %s5 = sld [smem:[#allocation0]]
  $region34: #{forward.1} parent=0
    _
  %s7 = ssub.s32 1, %s5
  %s8 = scalar_select 0, %s7, %s5
  $region1: #{forward.1} parent=0
    #allocation2 [shape = 'u8[1024]{0}', space=vmem, size = 0x400, scoped, tag = 'input window, operand 0, single buffered']
    #allocation3 [shape = 's32[1]{0}', space=sflag, size = 0x4, scoped, tag = 'scoped memory for forward.1']
    #allocation4 [shape = 'u8[20480]{0}', space=vmem, size = 0x5000, scoped, tag = 'input window, operand 3, single buffered']
    #allocation5 [shape = 's32[1]{0}', space=sflag, size = 0x4, scoped, tag = 'scoped memory for forward.1']
    %9 = vsyncpa [#allocation3], 0
    %10 = vsyncpa [#allocation5], 0
    // Predicated region
    $region2: #{forward.1} parent=1 // pred_check
      _
    $region3: #{forward.1} parent=1 // pred_check_branch
      %12 = sbr.rel (0) target = $region5
    $region4: #{forward.1} parent=1 // pred_region
      %s14 = ssub.s32 32, 32
      %15 = vsyncadd [#allocation3], %s14
      %s17 = sshll.u32 [#allocation2], 4
      %s18 = int_to_ptr.vmem [resolvable:$true] %s17
      %20 = dma.hbm_to_vmem [thread:$0]  %s0, 32, %s18, [#allocation3]
    $region5: #{forward.1} parent=1 // pred_fallthru
      _
    // Predicated region
    $region6: #{forward.1} parent=1 // pred_check
      _
    $region7: #{forward.1} parent=1 // pred_check_branch
      %22 = sbr.rel (0) target = $region9
    $region8: #{forward.1} parent=1 // pred_region
      _
    $region9: #{forward.1} parent=1 // pred_fallthru
      _
    // Predicated region
    $region10: #{forward.1} parent=1 // pred_check
      _
    $region11: #{forward.1} parent=1 // pred_check_branch
      %24 = sbr.rel (0) target = $region13
    $region12: #{forward.1} parent=1 // pred_region
      _
    $region13: #{forward.1} parent=1 // pred_fallthru
      _
    // Predicated region
    $region14: #{forward.1} parent=1 // pred_check
      _
    $region15: #{forward.1} parent=1 // pred_check_branch
      %26 = sbr.rel (0) target = $region17
    $region16: #{forward.1} parent=1 // pred_region
      %s28 = ssub.s32 640, 640
      %29 = vsyncadd [#allocation5], %s28
      %s30 = sshll.u32 [#allocation4], 4
      %s31 = int_to_ptr.vmem [resolvable:$true] %s30
      %36 = dma.hbm_to_vmem [thread:$0]  %s3, 640, %s31, [#allocation5], 128, 128, 8
    $region17: #{forward.1} parent=1 // pred_fallthru
      _
    // Predicated region
    $region18: #{forward.1} parent=1 // pred_check
      _
    $region19: #{forward.1} parent=1 // pred_check_branch
      %38 = sbr.rel (0) target = $region21
    $region20: #{forward.1} parent=1 // pred_region
      %39 = dma.done [#allocation3], 32
    $region21: #{forward.1} parent=1 // pred_fallthru
      _
    // Predicated region
    $region22: #{forward.1} parent=1 // pred_check
      _
    $region23: #{forward.1} parent=1 // pred_check_branch
      %41 = sbr.rel (0) target = $region25
    $region24: #{forward.1} parent=1 // pred_region
      %42 = dma.done [#allocation5], 640
    $region25: #{forward.1} parent=1 // pred_fallthru
      _
    %v43 = vld [vmem:[#allocation2] sm:$0x3]
    %v44 = vld [vmem:[%s1] sm:$0x3]
    %v45 = vld [vmem:[%s2] sm:$0x3]
    %47 = vrot.lane.b32.xlu0 %v44, 32
    %v48 = vpop.permute.xlu0 %47
    %51 = vrot.lane.b32.xlu0 %v45, 36
    %v52 = vpop.permute.xlu0 %51
    %vm54 = vcmask 261120
    %v55 = vsel %vm54, %v43, %v48
    %vm56 = vcmask 293888
    %v57 = vsel %vm56, %v55, %v52
    %v58 = vld [vmem:[#allocation4] sm:$0xff]
    %v59 = vld [vmem:[#allocation4 + $0x8] sm:$0xff]
    %v60 = vld [vmem:[#allocation4 + $0x10] sm:$0xff]
    %v61 = vld [vmem:[#allocation4 + $0x18] sm:$0xff]
    %v62 = vld [vmem:[#allocation4 + $0x20] sm:$0x7f]
    %vm63 = vcmask 318464
    %v65 = vsel %vm63, %v57, 0
    %vm67 = vcmask 1046528
    %v69 = vsel %vm67, %v62, 0
    %71 = vmatprep.subr.mxu0 0.0
    %72 = vmatpush1.msra.mxu0 %v58
    %73 = vmatprep.subr.mxu0 0.0
    %74 = vmatpush1.msra.mxu0 %v59
    %75 = vmatprep.subr.mxu0 0.0
    %76 = vmatpush1.msra.mxu0 %v60
    %77 = vmatprep.subr.mxu0 0.0
    %78 = vmatpush1.msra.mxu0 %v61
    %79 = vmatprep.subr.mxu0 0.0
    %80 = vmatpush1.msra.mxu0 %v69
    %81 = vmatprep.subr.mxu0 0.0
    %82 = vmatpush1.msra.mxu0 0.0
    %83 = vmatprep.subr.mxu0 0.0
    %84 = vmatpush1.msra.mxu0 0.0
    %85 = vmatprep.subr.mxu0 0.0
    %86 = vmatpush1.msra.mxu0 0.0
    %87 = vmatprep.subr.mxu0 0.0
    %88 = vmatpush1.msra.mxu0 0.0
    %89 = vmatprep.subr.mxu0 0.0
    %90 = vmatpush1.msra.mxu0 0.0
    %91 = vmatprep.subr.mxu0 0.0
    %92 = vmatpush1.msra.mxu0 0.0
    %93 = vmatprep.subr.mxu0 0.0
    %94 = vmatpush1.msra.mxu0 0.0
    %95 = vmatprep.subr.mxu0 0.0
    %96 = vmatpush1.msra.mxu0 0.0
    %97 = vmatprep.subr.mxu0 0.0
    %98 = vmatpush1.msra.mxu0 0.0
    %99 = vmatprep.subr.mxu0 0.0
    %100 = vmatpush1.msra.mxu0 0.0
    %101 = vmatprep.subr.mxu0 0.0
    %102 = vmatpush1.msra.mxu0 0.0
    %103 = vmatprep.subr.mxu0 0.0
    %104 = vmatpush1.msra.mxu0 0.0
    %105 = vmatprep.subr.mxu0 0.0
    %106 = vmatpush1.msra.mxu0 0.0
    %107 = vmatprep.subr.mxu0 0.0
    %108 = vmatpush1.msra.mxu0 0.0
    %109 = vmatprep.subr.mxu0 0.0
    %110 = vmatpush1.msra.mxu0 0.0
    %111 = vmatprep.subr.mxu0 0.0
    %112 = vmatpush1.msra.mxu0 0.0
    %113 = vmatprep.subr.mxu0 0.0
    %114 = vmatpush1.msra.mxu0 0.0
    %115 = vmatprep.subr.mxu0 0.0
    %116 = vmatpush1.msra.mxu0 0.0
    %117 = vmatprep.subr.mxu0 0.0
    %118 = vmatpush1.msra.mxu0 0.0
    %119 = vmatprep.subr.mxu0 0.0
    %120 = vmatpush1.msra.mxu0 0.0
    %121 = vmatprep.subr.mxu0 0.0
    %122 = vmatpush1.msra.mxu0 0.0
    %123 = vmatprep.subr.mxu0 0.0
    %124 = vmatpush1.msra.mxu0 0.0
    %125 = vmatprep.subr.mxu0 0.0
    %126 = vmatpush1.msra.mxu0 0.0
    %127 = vmatprep.subr.mxu0 0.0
    %128 = vmatpush1.msra.mxu0 0.0
    %129 = vmatprep.subr.mxu0 0.0
    %130 = vmatpush1.msra.mxu0 0.0
    %131 = vmatprep.subr.mxu0 0.0
    %132 = vmatpush1.msra.mxu0 0.0
    %133 = vmatprep.subr.mxu0 0.0
    %134 = vmatpush1.msra.mxu0 0.0
    %135 = vmatprep.mubr.f32.mxu0 0.0
    %136 = vmatmul.mubr.f32.gmra.mrb[0].mxu0 %v65
    %v137 = vpop.f32.mrb[0].mxu0
    %v138 = vadd.f32 0.0, %v137
    %v139 = vpop.f32.mrb[0].mxu0
    %140 = vdwg.mxu0
    %vm141 = vcmask 320512
    %142 = vst.msk [vmem:[%s4] sm:$0x3] %vm141, %v138
    // Predicated region
    $region26: #{forward.1} parent=1 // pred_check
      _
    $region27: #{forward.1} parent=1 // pred_check_branch
      %144 = sbr.rel (0) target = $region29
    $region28: #{forward.1} parent=1 // pred_region
      _
    $region29: #{forward.1} parent=1 // pred_fallthru
      _
    // Predicated region
    $region30: #{forward.1} parent=1 // pred_check
      _
    $region31: #{forward.1} parent=1 // pred_check_branch
      %146 = sbr.rel (0) target = $region33
    $region32: #{forward.1} parent=1 // pred_region
      _
    $region33: #{forward.1} parent=1 // pred_fallthru
      _
    %147 = vsyncpa [#allocation3], 1
    %148 = vsyncpa [#allocation5], 1

</llo_original>
